<compile_context>
chip_gen: v7x
topology: tpu7x:2x2x1
jax: 0.10.0
libtpu: 0.0.40
codegen_flags: <defaults>
</compile_context>

<pallas_src>
import math
import functools

import numpy as np
import jax
import jax.numpy as jnp
from jax.experimental import pallas as pl
from jax.experimental.pallas import tpu as pltpu


# --------------------------------------------------------------------------
# Parameter / buffer construction (plain JAX glue, deterministic)
# --------------------------------------------------------------------------
def build_positional_encoding(block_size: int, n_embd: int) -> jnp.ndarray:
    """Replicates the torch buffer `pe` of shape (1, block_size, n_embd)."""
    position = jnp.arange(block_size, dtype=jnp.float32)[:, None]          # (S, 1)
    div_term = jnp.exp(
        jnp.arange(0, n_embd, 2, dtype=jnp.float32) * -(math.log(10000.0) / n_embd)
    )                                                                      # (C/2,)
    pe = jnp.zeros((block_size, n_embd), dtype=jnp.float32)
    pe = pe.at[:, 0::2].set(jnp.sin(position * div_term))
    pe = pe.at[:, 1::2].set(jnp.cos(position * div_term))
    return pe[None, :, :]                                                  # (1, S, C)


# --------------------------------------------------------------------------
# Pallas kernels
# --------------------------------------------------------------------------
def _posenc_eval_kernel(x_ref, pe_ref, o_ref):
    # x_ref/o_ref: (bm, bn) row-tile; pe_ref: (1, bn) broadcast over rows.
    o_ref[...] = x_ref[...] + pe_ref[...]


def _posenc_train_kernel(x_ref, pe_ref, bits_ref, o_ref, *, keep_threshold, scale):
    # Inverted dropout, integer-domain mask: keep iff bits >= p * 2^32.
    y = x_ref[...] + pe_ref[...]
    keep = bits_ref[...] >= keep_threshold                 # uint32 compare
    scaled = y * jnp.asarray(scale, y.dtype)
    o_ref[...] = jnp.where(keep, scaled, jnp.zeros_like(y))


# --------------------------------------------------------------------------
# Tile-size selection (lane-dense, VMEM-safe on v5e/v6e/v7x)
# --------------------------------------------------------------------------
def _row_tile(n_rows: int, target: int = 128) -> int:
    if n_rows <= target:
        return n_rows                      # full dim -> always legal
    return (target // 8) * 8               # multiple of 8 (sublane quantum)


def _lane_tile(n_lanes: int, target: int = 4096) -> int:
    if n_lanes <= target:
        return n_lanes                     # full dim -> always legal
    return (target // 128) * 128           # multiple of 128 (lane quantum)


# --------------------------------------------------------------------------
# Wrapper
# --------------------------------------------------------------------------
def positional_encoding_forward(x, pe, *, dropout_p=0.1, training=False, rng_key=None):
    """x: (B, T, C).  pe: (1, block_size, C).  Returns (B, T, C)."""
    B, T, C = x.shape
    dtype = x.dtype

    # Lane-dense 2D views: rows = batch, lanes = T*C (multiple of 128 for
    # typical T, C; falls back to full-dim blocks otherwise).
    n_lanes = T * C
    x2 = x.reshape(B, n_lanes)
    pe_row = pe[0, :T, :].astype(dtype).reshape(1, n_lanes)   # (1, T*C)

    bm = _row_tile(B)
    bn = _lane_tile(n_lanes)
    grid = (pl.cdiv(B, bm), pl.cdiv(n_lanes, bn))

    x_spec = pl.BlockSpec((bm, bn), lambda i, j: (i, j))
    pe_spec = pl.BlockSpec((1, bn), lambda i, j: (0, j))
    out_spec = pl.BlockSpec((bm, bn), lambda i, j: (i, j))
    out_shape = jax.ShapeDtypeStruct((B, n_lanes), dtype)

    compiler_params = pltpu.CompilerParams(
        dimension_semantics=("parallel", "parallel"),
        vmem_limit_bytes=64 * 1024 * 1024,
    )

    if (not training) or dropout_p == 0.0:
        out2 = pl.pallas_call(
            _posenc_eval_kernel,
            out_shape=out_shape,
            grid=grid,
            in_specs=[x_spec, pe_spec],
            out_specs=out_spec,
            compiler_params=compiler_params,
        )(x2, pe_row)
        return out2.reshape(B, T, C)

    # Training path: random bits generated in the wrapper (portable; the TPU
    # hardware PRNG has no CPU/interpret lowering) and streamed like x.
    if rng_key is None:
        rng_key = jax.random.PRNGKey(0)
    bits = jax.random.bits(rng_key, (B, n_lanes), dtype=jnp.uint32)

    keep_threshold = np.uint32(min(int(round(float(dropout_p) * 2**32)), 2**32 - 1))
    scale = 1.0 / (1.0 - float(dropout_p))
    kernel = functools.partial(
        _posenc_train_kernel, keep_threshold=keep_threshold, scale=scale
    )
    out2 = pl.pallas_call(
        kernel,
        out_shape=out_shape,
        grid=grid,
        in_specs=[x_spec, pe_spec, x_spec],   # bits tiled exactly like x
        out_specs=out_spec,
        compiler_params=compiler_params,
    )(x2, pe_row, bits)
    return out2.reshape(B, T, C)


# --------------------------------------------------------------------------
# Demo / correctness check
# --------------------------------------------------------------------------
if __name__ == "__main__":
    # Small config consistent with the module: block_size=16, n_embd=32, dropout=0.1
    batch, seq, block_size, n_embd, dropout_p = 2, 8, 16, 32, 0.1

    key = jax.random.PRNGKey(0)
    kx, kd = jax.random.split(key)
    x = jax.random.normal(kx, (batch, seq, n_embd), dtype=jnp.float32)

    pe = build_positional_encoding(block_size, n_embd)

    # Eval-mode forward (dropout is identity) -- exact PyTorch semantics.
    out_eval = positional_encoding_forward(x, pe, dropout_p=dropout_p, training=False)
    out_eval = jax.block_until_ready(out_eval)

    ref = np.asarray(x) + np.asarray(pe[:, :seq, :])
    assert out_eval.shape == (batch, seq, n_embd)
    np.testing.assert_allclose(np.asarray(out_eval), ref, rtol=1e-6, atol=1e-6)

    # Training-mode forward: every output element must be either 0 (dropped)
    # or (x + pe) / (1 - p) (kept, inverted-dropout scaling).
    out_train = positional_encoding_forward(
        x, pe, dropout_p=dropout_p, training=True, rng_key=kd
    )
    out_train = jax.block_until_ready(out_train)
    assert out_train.shape == (batch, seq, n_embd)

    ot = np.asarray(out_train)
    scaled_ref = ref / (1.0 - dropout_p)
    is_dropped = np.isclose(ot, 0.0, atol=1e-6)
    is_kept = np.isclose(ot, scaled_ref, rtol=1e-5, atol=1e-6)
    assert np.all(is_dropped | is_kept)

    print("KERNEL_OK")
</pallas_src>

<mosaic_0001>
module attributes {stable_mosaic.version = 11 : i64} {
  func.func @_posenc_eval_kernel(%arg0: i32, %arg1: i32, %arg2: memref<2x256xf32, #tpu.memory_space<vmem>>, %arg3: memref<1x256xf32, #tpu.memory_space<vmem>>, %arg4: memref<2x256xf32, #tpu.memory_space<vmem>>) attributes {dimension_semantics = [#tpu.dimension_semantics<parallel>, #tpu.dimension_semantics<parallel>], iteration_bounds = array<i64: 1, 1>, scalar_prefetch = 0 : i64, scratch_operands = 0 : i64, tpu.core_type = #tpu.core_type<tc>, window_params = [{transform_indices = @transform_0, window_bounds = array<i64: 2, 256>}, {transform_indices = @transform_1, window_bounds = array<i64: 1, 256>}, {transform_indices = @transform_2, window_bounds = array<i64: 2, 256>}]} {
    %c0 = arith.constant 0 : index
    %c0_0 = arith.constant 0 : index
    %0 = vector.load %arg2[%c0, %c0_0] : memref<2x256xf32, #tpu.memory_space<vmem>>, vector<2x256xf32>
    %c0_1 = arith.constant 0 : index
    %c0_2 = arith.constant 0 : index
    %1 = vector.load %arg3[%c0_1, %c0_2] : memref<1x256xf32, #tpu.memory_space<vmem>>, vector<1x256xf32>
    %2 = vector.broadcast %1 : vector<1x256xf32> to vector<2x256xf32>
    %3 = arith.addf %0, %2 : vector<2x256xf32>
    %c0_3 = arith.constant 0 : index
    %c0_4 = arith.constant 0 : index
    %4 = vector.load %arg4[%c0_3, %c0_4] : memref<2x256xf32, #tpu.memory_space<vmem>>, vector<2x256xf32>
    tpu.vector_store %arg4[%c0_3, %c0_4], %3 {strides = array<i32>} : memref<2x256xf32, #tpu.memory_space<vmem>>, vector<2x256xf32>,
    return
  }
  func.func @transform_0(%arg0: i32, %arg1: i32) -> (i32, i32) {
    %c0_i32 = arith.constant 0 : i32
    return %arg0, %arg1 : i32, i32
  }
  func.func @transform_1(%arg0: i32, %arg1: i32) -> (i32, i32) {
    %c0_i32 = arith.constant 0 : i32
    %c0_i32_0 = arith.constant 0 : i32
    return %c0_i32, %arg1 : i32, i32
  }
  func.func @transform_2(%arg0: i32, %arg1: i32) -> (i32, i32) {
    %c0_i32 = arith.constant 0 : i32
    return %arg0, %arg1 : i32, i32
  }
}

</mosaic_0001>

<llo_original>
// kernel: tpu_custom_call.1
$region0: #{tpu_custom_call.1}
  #allocation0 [shape = 'u32[]', space=smem, size = 0x4, offset = 0x4, fixed_abs, tag = 'smem constant byte address 0x4 - core index']
  #allocation1 [shape = 'u32[144,128]{1,0:T(1,128)}', space=vmem, size = 0x12000, scoped, tag = 'internal scratch']
  %s0 = inlined_call_operand.hbm [shape: f32[2,256], index: 0, kind: input, shape index: {}]
  %s1 = inlined_call_operand.hbm [shape: f32[1,256], index: 1, kind: input, shape index: {}]
  %s2 = inlined_call_operand.hbm [shape: f32[2,256], index: 2, kind: output, shape index: {}]
  %s3 = sld [smem:[#allocation0]]
  $region26: #{tpu_custom_call.1} parent=0
    _
  %s5 = ssub.s32 1, %s3
  %s6 = scalar_select 0, %s5, %s3
  $region1: #{tpu_custom_call.1} parent=0
    #allocation2 [shape = 'u8[2048]{0}', space=vmem, size = 0x800, scoped, tag = 'input window, operand 0, single buffered']
    #allocation3 [shape = 's32[1]{0}', space=sflag, size = 0x4, scoped, tag = 'scoped memory for tpu_custom_call.1']
    #allocation4 [shape = 's32[1]{0}', space=sflag, size = 0x4, scoped, tag = 'scoped memory for tpu_custom_call.1']
    #allocation5 [shape = 'u8[1024]{0}', space=vmem, size = 0x400, scoped, tag = 'input window, operand 1, single buffered']
    #allocation6 [shape = 's32[1]{0}', space=sflag, size = 0x4, scoped, tag = 'scoped memory for tpu_custom_call.1']
    #allocation7 [shape = 'u8[2048]{0}', space=vmem, size = 0x800, scoped, tag = 'output window, operand 0, single buffered']
    %7 = vsyncpa [#allocation3], 0
    %8 = vsyncpa [#allocation6], 0
    %9 = vsyncpa [#allocation4], 0
    // Predicated region
    $region2: #{tpu_custom_call.1} parent=1 // pred_check
      _
    $region3: #{tpu_custom_call.1} parent=1 // pred_check_branch
      %11 = sbr.rel (0) target = $region5
    $region4: #{tpu_custom_call.1} parent=1 // pred_region
      %s13 = ssub.s32 64, 64
      %14 = vsyncadd [#allocation3], %s13
      %s16 = sshll.u32 [#allocation2], 4
      %s17 = int_to_ptr.vmem [resolvable:$true] %s16
      %19 = dma.hbm_to_vmem [thread:$0]  %s0, 64, %s17, [#allocation3]
    $region5: #{tpu_custom_call.1} parent=1 // pred_fallthru
      _
    // Predicated region
    $region6: #{tpu_custom_call.1} parent=1 // pred_check
      _
    $region7: #{tpu_custom_call.1} parent=1 // pred_check_branch
      %21 = sbr.rel (0) target = $region9
    $region8: #{tpu_custom_call.1} parent=1 // pred_region
      %s23 = ssub.s32 32, 32
      %24 = vsyncadd [#allocation6], %s23
      %s26 = sshll.u32 [#allocation5], 4
      %s27 = int_to_ptr.vmem [resolvable:$true] %s26
      %29 = dma.hbm_to_vmem [thread:$0]  %s1, 32, %s27, [#allocation6]
    $region9: #{tpu_custom_call.1} parent=1 // pred_fallthru
      _
    // Predicated region
    $region10: #{tpu_custom_call.1} parent=1 // pred_check
      _
    $region11: #{tpu_custom_call.1} parent=1 // pred_check_branch
      %31 = sbr.rel (0) target = $region13
    $region12: #{tpu_custom_call.1} parent=1 // pred_region
      %32 = dma.done [#allocation3], 64
    $region13: #{tpu_custom_call.1} parent=1 // pred_fallthru
      _
    // Predicated region
    $region14: #{tpu_custom_call.1} parent=1 // pred_check
      _
    $region15: #{tpu_custom_call.1} parent=1 // pred_check_branch
      %34 = sbr.rel (0) target = $region17
    $region16: #{tpu_custom_call.1} parent=1 // pred_region
      %35 = dma.done [#allocation6], 32
    $region17: #{tpu_custom_call.1} parent=1 // pred_fallthru
      _
    %v36 = vld [vmem:[#allocation2] sm:$0xf]
    %v37 = vld [vmem:[#allocation5] sm:$0x3]
    %v39 = vlaneseq
    %v40 = vshrl.u32 %v39, 7
    %v41 = vsub.s32 0, %v40
    %v42 = vrot.slane %v37, %v41
    %v43 = vlaneseq
    %v44 = vshrl.u32 %v43, 7
    %v45 = vsub.s32 1, %v44
    %v46 = vrot.slane %v37, %v45
    %v47 = vcombine.low %v42, %v46
    %v49 = vunpack.c.l.s4 1983009808
    %v50 = vunpack.c.0.s8 %v49
    %v51 = vlaneseq
    %v52 = vshrl.u32 %v51, 7
    %v53 = vsub.s32 %v50, %v52
    %v54 = vrot.slane %v47, %v53
    %v56 = vadd.f32 %v36, %v54
    %57 = vst [vmem:[#allocation7] sm:$0xf] %v56
    // Predicated region
    $region18: #{tpu_custom_call.1} parent=1 // pred_check
      _
    $region19: #{tpu_custom_call.1} parent=1 // pred_check_branch
      %59 = sbr.rel (0) target = $region21
    $region20: #{tpu_custom_call.1} parent=1 // pred_region
      %s61 = ssub.s32 64, 64
      %62 = vsyncadd [#allocation4], %s61
      %s64 = sshll.u32 [#allocation7], 4
      %s65 = int_to_ptr.vmem [resolvable:$true] %s64
      %67 = dma.vmem_to_hbm [thread:$0]  %s65, 64, %s2, [#allocation4]
    $region21: #{tpu_custom_call.1} parent=1 // pred_fallthru
      _
    // Predicated region
    $region22: #{tpu_custom_call.1} parent=1 // pred_check
      _
    $region23: #{tpu_custom_call.1} parent=1 // pred_check_branch
      %69 = sbr.rel (0) target = $region25
    $region24: #{tpu_custom_call.1} parent=1 // pred_region
      %70 = dma.done [#allocation4], 64
    $region25: #{tpu_custom_call.1} parent=1 // pred_fallthru
      _
    %71 = vsyncpa [#allocation3], 1
    %72 = vsyncpa [#allocation6], 1
    %73 = vsyncpa [#allocation4], 1

</llo_original>
